<compile_context>
chip_gen: v7x
topology: tpu7x:2x2x1
jax: 0.10.0
libtpu: 0.0.40
codegen_flags: <defaults>
</compile_context>

<pallas_src>
import functools

import jax
import jax.numpy as jnp
from jax import lax
from jax.experimental import pallas as pl
from jax.experimental.pallas import tpu as pltpu


def _attention_kernel(x_ref, w_ref, b_ref, o_ref, *, batch: int, seq: int):
    """Single-invocation kernel (no grid): whole problem lives in VMEM.

    x_ref: (B*T, D)  row-major flattened lstm_out (flatten done in wrapper)
    w_ref: (D, D)    PyTorch-layout Linear weight (out_features, in_features)
    b_ref: (1, D)    bias
    o_ref: (B, D)    context output
    """
    x = x_ref[...].astype(jnp.float32)            # (B*T, D)
    w = w_ref[...]                                # (D, D)
    b = b_ref[...].astype(jnp.float32)            # (1, D)

    # logits = x @ W^T + b  -- one MXU matmul for all (batch, time) rows.
    logits = lax.dot_general(
        x, w,
        dimension_numbers=(((1,), (1,)), ((), ())),
        preferred_element_type=jnp.float32,
    ) + b                                          # (B*T, D)

    # Per-batch numerically-stable softmax over the seq axis, fused with the
    # weighted sum. Row groups of T=8 are static, sublane-aligned slices, so
    # no relayout / in-kernel reshape is needed.
    rows = []
    for bi in range(batch):
        lg = logits[bi * seq:(bi + 1) * seq, :]          # (T, D)
        xb = x[bi * seq:(bi + 1) * seq, :]               # (T, D)
        m = jnp.max(lg, axis=0, keepdims=True)           # (1, D)
        e = jnp.exp(lg - m)                              # (T, D)
        s = jnp.sum(e, axis=0, keepdims=True)            # (1, D)
        num = jnp.sum(e * xb, axis=0, keepdims=True)     # (1, D)
        rows.append(num / s)                             # exact divide
    o_ref[...] = jnp.concatenate(rows, axis=0).astype(o_ref.dtype)


def attention_forward(lstm_out, weight, bias):
    """lstm_out: (B, T, D); weight: (D, D) PyTorch-style (out, in); bias: (D,)."""
    B, T, D = lstm_out.shape
    x2d = lstm_out.reshape(B * T, D)   # free HBM-level reshape (wrapper side)
    b2d = bias.reshape(1, D)

    kernel = functools.partial(_attention_kernel, batch=B, seq=T)
    return pl.pallas_call(
        kernel,
        out_shape=jax.ShapeDtypeStruct((B, D), lstm_out.dtype),
        in_specs=[
            pl.BlockSpec(memory_space=pltpu.MemorySpace.VMEM),
            pl.BlockSpec(memory_space=pltpu.MemorySpace.VMEM),
            pl.BlockSpec(memory_space=pltpu.MemorySpace.VMEM),
        ],
        out_specs=pl.BlockSpec(memory_space=pltpu.MemorySpace.VMEM),
    )(x2d, weight, b2d)


def attention_reference(lstm_out, weight, bias):
    logits = jnp.einsum(
        "btd,od->bto", lstm_out, weight, precision=lax.Precision.HIGHEST
    ) + bias
    attn = jax.nn.softmax(logits, axis=1)
    return jnp.sum(attn * lstm_out, axis=1)


if __name__ == "__main__":
    hidden_size = 16
    D = hidden_size * 2        # 32 (bidirectional-LSTM feature width)
    B, T = 2, 8

    key = jax.random.PRNGKey(0)
    k_x, k_w, k_b = jax.random.split(key, 3)

    # Deterministic nn.Linear-style fan-in-scaled uniform init.
    bound = 1.0 / jnp.sqrt(D)
    weight = jax.random.uniform(k_w, (D, D), jnp.float32, -bound, bound)  # (out, in)
    bias = jax.random.uniform(k_b, (D,), jnp.float32, -bound, bound)

    lstm_out = jax.random.normal(k_x, (B, T, D), jnp.float32)

    ctx = attention_forward(lstm_out, weight, bias)
    jax.block_until_ready(ctx)

    ref = attention_reference(lstm_out, weight, bias)
    assert ctx.shape == (B, D)
    assert jnp.allclose(ctx, ref, atol=1e-4, rtol=1e-4), float(
        jnp.max(jnp.abs(ctx - ref))
    )

    print("KERNEL_OK")
</pallas_src>

<mosaic_0001>
module attributes {stable_mosaic.version = 11 : i64} {
  func.func @_attention_kernel(%arg0: memref<16x32xf32, #tpu.memory_space<vmem>>, %arg1: memref<32x32xf32, #tpu.memory_space<vmem>>, %arg2: memref<1x32xf32, #tpu.memory_space<vmem>>, %arg3: memref<2x32xf32, #tpu.memory_space<vmem>>) attributes {dimension_semantics = [], scalar_prefetch = 0 : i64, scratch_operands = 0 : i64, tpu.core_type = #tpu.core_type<tc>} {
    %c0 = arith.constant 0 : index
    %c0_0 = arith.constant 0 : index
    %0 = vector.load %arg0[%c0, %c0_0] : memref<16x32xf32, #tpu.memory_space<vmem>>, vector<16x32xf32>
    %c0_1 = arith.constant 0 : index
    %c0_2 = arith.constant 0 : index
    %1 = vector.load %arg1[%c0_1, %c0_2] : memref<32x32xf32, #tpu.memory_space<vmem>>, vector<32x32xf32>
    %c0_3 = arith.constant 0 : index
    %c0_4 = arith.constant 0 : index
    %2 = vector.load %arg2[%c0_3, %c0_4] : memref<1x32xf32, #tpu.memory_space<vmem>>, vector<1x32xf32>
    %cst = arith.constant dense<0.000000e+00> : vector<16x32xf32>
    %3 = tpu.matmul %0, %1, %cst {dimension_numbers = #tpu.dot_dimension_numbers<[1], [1], [0], [0], [0, 0, 1, 0], [], []>} : vector<16x32xf32>, vector<32x32xf32>, vector<16x32xf32> -> vector<16x32xf32>
    %4 = vector.broadcast %2 : vector<1x32xf32> to vector<16x32xf32>
    %5 = arith.addf %3, %4 : vector<16x32xf32>
    %6 = vector.extract_strided_slice %5 {offsets = [0, 0], sizes = [8, 32], strides = [1, 1]} : vector<16x32xf32> to vector<8x32xf32>
    %7 = vector.extract_strided_slice %0 {offsets = [0, 0], sizes = [8, 32], strides = [1, 1]} : vector<16x32xf32> to vector<8x32xf32>
    %cst_5 = arith.constant dense<0xFF800000> : vector<32xf32>
    %8 = vector.multi_reduction <maximumf>, %6, %cst_5 [0] : vector<8x32xf32> to vector<32xf32>
    %9 = vector.shape_cast %8 : vector<32xf32> to vector<1x32xf32>
    %10 = vector.broadcast %9 : vector<1x32xf32> to vector<8x32xf32>
    %11 = arith.subf %6, %10 : vector<8x32xf32>
    %12 = math.exp %11 : vector<8x32xf32>
    %cst_6 = arith.constant dense<0.000000e+00> : vector<32xf32>
    %13 = vector.multi_reduction <add>, %12, %cst_6 [0] : vector<8x32xf32> to vector<32xf32>
    %14 = vector.shape_cast %13 : vector<32xf32> to vector<1x32xf32>
    %15 = arith.mulf %12, %7 : vector<8x32xf32>
    %cst_7 = arith.constant dense<0.000000e+00> : vector<32xf32>
    %16 = vector.multi_reduction <add>, %15, %cst_7 [0] : vector<8x32xf32> to vector<32xf32>
    %17 = vector.shape_cast %16 : vector<32xf32> to vector<1x32xf32>
    %18 = arith.divf %17, %14 : vector<1x32xf32>
    %19 = vector.extract_strided_slice %5 {offsets = [8, 0], sizes = [8, 32], strides = [1, 1]} : vector<16x32xf32> to vector<8x32xf32>
    %20 = vector.extract_strided_slice %0 {offsets = [8, 0], sizes = [8, 32], strides = [1, 1]} : vector<16x32xf32> to vector<8x32xf32>
    %cst_8 = arith.constant dense<0xFF800000> : vector<32xf32>
    %21 = vector.multi_reduction <maximumf>, %19, %cst_8 [0] : vector<8x32xf32> to vector<32xf32>
    %22 = vector.shape_cast %21 : vector<32xf32> to vector<1x32xf32>
    %23 = vector.broadcast %22 : vector<1x32xf32> to vector<8x32xf32>
    %24 = arith.subf %19, %23 : vector<8x32xf32>
    %25 = math.exp %24 : vector<8x32xf32>
    %cst_9 = arith.constant dense<0.000000e+00> : vector<32xf32>
    %26 = vector.multi_reduction <add>, %25, %cst_9 [0] : vector<8x32xf32> to vector<32xf32>
    %27 = vector.shape_cast %26 : vector<32xf32> to vector<1x32xf32>
    %28 = arith.mulf %25, %20 : vector<8x32xf32>
    %cst_10 = arith.constant dense<0.000000e+00> : vector<32xf32>
    %29 = vector.multi_reduction <add>, %28, %cst_10 [0] : vector<8x32xf32> to vector<32xf32>
    %30 = vector.shape_cast %29 : vector<32xf32> to vector<1x32xf32>
    %31 = arith.divf %30, %27 : vector<1x32xf32>
    %32 = tpu.concatenate %18, %31 in 0 : vector<1x32xf32>, vector<1x32xf32> -> vector<2x32xf32>
    %c0_11 = arith.constant 0 : index
    %c0_12 = arith.constant 0 : index
    %33 = vector.load %arg3[%c0_11, %c0_12] : memref<2x32xf32, #tpu.memory_space<vmem>>, vector<2x32xf32>
    tpu.vector_store %arg3[%c0_11, %c0_12], %32 {strides = array<i32>} : memref<2x32xf32, #tpu.memory_space<vmem>>, vector<2x32xf32>,
    return
  }
}

</mosaic_0001>

<llo_original>
// kernel: tpu_custom_call.1
$region0: #{tpu_custom_call.1}
  #allocation0 [shape = 'u32[]', space=smem, size = 0x4, offset = 0x4, fixed_abs, tag = 'smem constant byte address 0x4 - core index']
  #allocation1 [shape = 'u32[144,128]{1,0:T(1,128)}', space=vmem, size = 0x12000, scoped, tag = 'internal scratch']
  %s0 = inlined_call_operand.hbm [shape: f32[16,32], index: 0, kind: input, shape index: {}]
  %s1 = inlined_call_operand.hbm [shape: f32[32,32], index: 1, kind: input, shape index: {}]
  %s2 = inlined_call_operand.vmem [shape: f32[1,32], index: 2, kind: input, shape index: {}]
  %s3 = inlined_call_operand.hbm [shape: f32[2,32], index: 3, kind: output, shape index: {}]
  %s4 = sld [smem:[#allocation0]]
  $region30: #{tpu_custom_call.1} parent=0
    _
  %s6 = ssub.s32 1, %s4
  %s7 = scalar_select 0, %s6, %s4
  $region1: #{tpu_custom_call.1} parent=0
    #allocation2 [shape = 'u8[8192]{0}', space=vmem, size = 0x2000, scoped, tag = 'input window, operand 0, single buffered']
    #allocation3 [shape = 's32[1]{0}', space=sflag, size = 0x4, scoped, tag = 'scoped memory for tpu_custom_call.1']
    #allocation4 [shape = 's32[1]{0}', space=sflag, size = 0x4, scoped, tag = 'scoped memory for tpu_custom_call.1']
    #allocation5 [shape = 'u8[16384]{0}', space=vmem, size = 0x4000, scoped, tag = 'input window, operand 1, single buffered']
    #allocation6 [shape = 's32[1]{0}', space=sflag, size = 0x4, scoped, tag = 'scoped memory for tpu_custom_call.1']
    #allocation7 [shape = 'u8[1024]{0}', space=vmem, size = 0x400, scoped, tag = 'output window, operand 0, single buffered']
    %8 = vsyncpa [#allocation3], 0
    %9 = vsyncpa [#allocation6], 0
    %10 = vsyncpa [#allocation4], 0
    // Predicated region
    $region2: #{tpu_custom_call.1} parent=1 // pred_check
      _
    $region3: #{tpu_custom_call.1} parent=1 // pred_check_branch
      %12 = sbr.rel (0) target = $region5
    $region4: #{tpu_custom_call.1} parent=1 // pred_region
      %s14 = ssub.s32 256, 256
      %15 = vsyncadd [#allocation3], %s14
      %s16 = sshll.u32 [#allocation2], 4
      %s17 = int_to_ptr.vmem [resolvable:$true] %s16
      %22 = dma.hbm_to_vmem [thread:$0]  %s0, 256, %s17, [#allocation3], 128, 128, 8
    $region5: #{tpu_custom_call.1} parent=1 // pred_fallthru
      _
    // Predicated region
    $region6: #{tpu_custom_call.1} parent=1 // pred_check
      _
    $region7: #{tpu_custom_call.1} parent=1 // pred_check_branch
      %24 = sbr.rel (0) target = $region9
    $region8: #{tpu_custom_call.1} parent=1 // pred_region
      %s26 = ssub.s32 512, 512
      %27 = vsyncadd [#allocation6], %s26
      %s28 = sshll.u32 [#allocation5], 4
      %s29 = int_to_ptr.vmem [resolvable:$true] %s28
      %34 = dma.hbm_to_vmem [thread:$0]  %s1, 512, %s29, [#allocation6], 128, 128, 8
    $region9: #{tpu_custom_call.1} parent=1 // pred_fallthru
      _
    // Predicated region
    $region10: #{tpu_custom_call.1} parent=1 // pred_check
      _
    $region11: #{tpu_custom_call.1} parent=1 // pred_check_branch
      %36 = sbr.rel (0) target = $region13
    $region12: #{tpu_custom_call.1} parent=1 // pred_region
      _
    $region13: #{tpu_custom_call.1} parent=1 // pred_fallthru
      _
    // Predicated region
    $region14: #{tpu_custom_call.1} parent=1 // pred_check
      _
    $region15: #{tpu_custom_call.1} parent=1 // pred_check_branch
      %38 = sbr.rel (0) target = $region17
    $region16: #{tpu_custom_call.1} parent=1 // pred_region
      %39 = dma.done [#allocation3], 256
    $region17: #{tpu_custom_call.1} parent=1 // pred_fallthru
      _
    // Predicated region
    $region18: #{tpu_custom_call.1} parent=1 // pred_check
      _
    $region19: #{tpu_custom_call.1} parent=1 // pred_check_branch
      %41 = sbr.rel (0) target = $region21
    $region20: #{tpu_custom_call.1} parent=1 // pred_region
      %42 = dma.done [#allocation6], 512
    $region21: #{tpu_custom_call.1} parent=1 // pred_fallthru
      _
    %v43 = vld [vmem:[#allocation2] sm:$0xff]
    %v44 = vld [vmem:[#allocation2 + $0x8] sm:$0xff]
    %v45 = vld [vmem:[#allocation5] sm:$0xff]
    %v46 = vld [vmem:[#allocation5 + $0x8] sm:$0xff]
    %v47 = vld [vmem:[#allocation5 + $0x10] sm:$0xff]
    %v48 = vld [vmem:[#allocation5 + $0x18] sm:$0xff]
    %v49 = vld [vmem:[%s2] sm:$0x1]
    %v51 = vlaneseq
    %v52 = vshrl.u32 %v51, 7
    %v53 = vsub.s32 0, %v52
    %v54 = vrot.slane %v49, %v53
    %vm56 = vcmask 261120
    %v58 = vsel %vm56, %v43, 0
    %v61 = vsel %vm56, %v44, 0
    %v64 = vsel %vm56, %v45, 0
    %v67 = vsel %vm56, %v46, 0
    %v70 = vsel %vm56, %v47, 0
    %v73 = vsel %vm56, %v48, 0
    %75 = vmatprep.subr.mxu0 0.0
    %76 = vmatpush1.xpose.msra.mxu0 %v64
    %77 = vmatprep.subr.mxu0 0.0
    %78 = vmatpush1.xpose.msra.mxu0 %v67
    %79 = vmatprep.subr.mxu0 0.0
    %80 = vmatpush1.xpose.msra.mxu0 %v70
    %81 = vmatprep.subr.mxu0 0.0
    %82 = vmatpush1.xpose.msra.mxu0 %v73
    %83 = vmatprep.subr.mxu0 0.0
    %84 = vmatpush1.xpose.msra.mxu0 0.0
    %85 = vmatprep.subr.mxu0 0.0
    %86 = vmatpush1.xpose.msra.mxu0 0.0
    %87 = vmatprep.subr.mxu0 0.0
    %88 = vmatpush1.xpose.msra.mxu0 0.0
    %89 = vmatprep.subr.mxu0 0.0
    %90 = vmatpush1.xpose.msra.mxu0 0.0
    %91 = vmatprep.subr.mxu0 0.0
    %92 = vmatpush1.xpose.msra.mxu0 0.0
    %93 = vmatprep.subr.mxu0 0.0
    %94 = vmatpush1.xpose.msra.mxu0 0.0
    %95 = vmatprep.subr.mxu0 0.0
    %96 = vmatpush1.xpose.msra.mxu0 0.0
    %97 = vmatprep.subr.mxu0 0.0
    %98 = vmatpush1.xpose.msra.mxu0 0.0
    %99 = vmatprep.subr.mxu0 0.0
    %100 = vmatpush1.xpose.msra.mxu0 0.0
    %101 = vmatprep.subr.mxu0 0.0
    %102 = vmatpush1.xpose.msra.mxu0 0.0
    %103 = vmatprep.subr.mxu0 0.0
    %104 = vmatpush1.xpose.msra.mxu0 0.0
    %105 = vmatprep.subr.mxu0 0.0
    %106 = vmatpush1.xpose.msra.mxu0 0.0
    %107 = vmatprep.subr.mxu0 0.0
    %108 = vmatpush1.xpose.msra.mxu0 0.0
    %109 = vmatprep.subr.mxu0 0.0
    %110 = vmatpush1.xpose.msra.mxu0 0.0
    %111 = vmatprep.subr.mxu0 0.0
    %112 = vmatpush1.xpose.msra.mxu0 0.0
    %113 = vmatprep.subr.mxu0 0.0
    %114 = vmatpush1.xpose.msra.mxu0 0.0
    %115 = vmatprep.subr.mxu0 0.0
    %116 = vmatpush1.xpose.msra.mxu0 0.0
    %117 = vmatprep.subr.mxu0 0.0
    %118 = vmatpush1.xpose.msra.mxu0 0.0
    %119 = vmatprep.subr.mxu0 0.0
    %120 = vmatpush1.xpose.msra.mxu0 0.0
    %121 = vmatprep.subr.mxu0 0.0
    %122 = vmatpush1.xpose.msra.mxu0 0.0
    %123 = vmatprep.subr.mxu0 0.0
    %124 = vmatpush1.xpose.msra.mxu0 0.0
    %125 = vmatprep.subr.mxu0 0.0
    %126 = vmatpush1.xpose.msra.mxu0 0.0
    %127 = vmatprep.subr.mxu0 0.0
    %128 = vmatpush1.xpose.msra.mxu0 0.0
    %129 = vmatprep.subr.mxu0 0.0
    %130 = vmatpush1.xpose.msra.mxu0 0.0
    %131 = vmatprep.subr.mxu0 0.0
    %132 = vmatpush1.xpose.msra.mxu0 0.0
    %133 = vmatprep.subr.mxu0 0.0
    %134 = vmatpush1.xpose.msra.mxu0 0.0
    %135 = vmatprep.subr.mxu0 0.0
    %136 = vmatpush1.xpose.msra.mxu0 0.0
    %137 = vmatprep.subr.mxu0 0.0
    %138 = vmatpush1.xpose.msra.mxu0 0.0
    %139 = vmatprep.mubr.f32.mxu0 0.0
    %140 = vmatmul.mubr.f32.gmra.mrb[0].mxu0 %v58
    %v141 = vpop.f32.mrb[0].mxu0
    %v142 = vadd.f32 %v54, %v141
    %v143 = vpop.f32.mrb[0].mxu0
    %144 = vmatprep.mubr.f32.mxu0 0.0
    %145 = vmatmul.mubr.f32.gmra.mrb[0].mxu0 %v61
    %v146 = vpop.f32.mrb[0].mxu0
    %v147 = vadd.f32 %v54, %v146
    %v148 = vpop.f32.mrb[0].mxu0
    %149 = vdwg.mxu0
    %v150 = vsel %vm56, %v142, -inf
    %v151 = vrot.slane %v150, 4
    %v152 = vmax.f32 %v150, %v151
    %v153 = vrot.slane %v152, 2
    %v154 = vmax.f32 %v152, %v153
    %v155 = vrot.slane %v154, 1
    %v156 = vmax.f32 %v154, %v155
    %v157 = vsub.f32 %v142, %v156
    %v158 = vmul.f32 %v157, 1.442695
    %v159 = vpow.pop %v158
    %v160 = vsel %vm56, %v159, 0.0
    %v161 = vrot.slane %v160, 4
    %v162 = vadd.f32 %v160, %v161
    %v163 = vrot.slane %v162, 2
    %v164 = vadd.f32 %v162, %v163
    %v165 = vrot.slane %v164, 1
    %v166 = vadd.f32 %v164, %v165
    %v167 = vmul.f32 %v159, %v43
    %v168 = vsel %vm56, %v167, 0.0
    %v169 = vrot.slane %v168, 4
    %v170 = vadd.f32 %v168, %v169
    %v171 = vrot.slane %v170, 2
    %v172 = vadd.f32 %v170, %v171
    %v173 = vrot.slane %v172, 1
    %v174 = vadd.f32 %v172, %v173
    %v175 = vrcp.pop %v166
    %v176 = vmul.f32 %v174, %v175
    %v177 = vsel %vm56, %v147, -inf
    %v178 = vrot.slane %v177, 4
    %v179 = vmax.f32 %v177, %v178
    %v180 = vrot.slane %v179, 2
    %v181 = vmax.f32 %v179, %v180
    %v182 = vrot.slane %v181, 1
    %v183 = vmax.f32 %v181, %v182
    %v184 = vsub.f32 %v147, %v183
    %v185 = vmul.f32 %v184, 1.442695
    %v186 = vpow.pop %v185
    %v187 = vsel %vm56, %v186, 0.0
    %v188 = vrot.slane %v187, 4
    %v189 = vadd.f32 %v187, %v188
    %v190 = vrot.slane %v189, 2
    %v191 = vadd.f32 %v189, %v190
    %v192 = vrot.slane %v191, 1
    %v193 = vadd.f32 %v191, %v192
    %v194 = vmul.f32 %v186, %v44
    %v195 = vsel %vm56, %v194, 0.0
    %v196 = vrot.slane %v195, 4
    %v197 = vadd.f32 %v195, %v196
    %v198 = vrot.slane %v197, 2
    %v199 = vadd.f32 %v197, %v198
    %v200 = vrot.slane %v199, 1
    %v201 = vadd.f32 %v199, %v200
    %v202 = vrcp.pop %v193
    %v203 = vmul.f32 %v201, %v202
    %vm204 = vcmask 1040384
    %v205 = vsel %vm204, %v176, %v203
    %vm206 = vcmask 254976
    %207 = vst.msk [vmem:[#allocation7] sm:$0x3] %vm206, %v205
    // Predicated region
    $region22: #{tpu_custom_call.1} parent=1 // pred_check
      _
    $region23: #{tpu_custom_call.1} parent=1 // pred_check_branch
      %209 = sbr.rel (0) target = $region25
    $region24: #{tpu_custom_call.1} parent=1 // pred_region
      %s211 = ssub.s32 32, 32
      %212 = vsyncadd [#allocation4], %s211
      %s214 = sshll.u32 [#allocation7], 4
      %s215 = int_to_ptr.vmem [resolvable:$true] %s214
      %217 = dma.vmem_to_hbm [thread:$0]  %s215, 32, %s3, [#allocation4]
    $region25: #{tpu_custom_call.1} parent=1 // pred_fallthru
      _
    // Predicated region
    $region26: #{tpu_custom_call.1} parent=1 // pred_check
      _
    $region27: #{tpu_custom_call.1} parent=1 // pred_check_branch
      %219 = sbr.rel (0) target = $region29
    $region28: #{tpu_custom_call.1} parent=1 // pred_region
      %220 = dma.done [#allocation4], 32
    $region29: #{tpu_custom_call.1} parent=1 // pred_fallthru
      _
    %221 = vsyncpa [#allocation3], 1
    %222 = vsyncpa [#allocation6], 1
    %223 = vsyncpa [#allocation4], 1

</llo_original>
